<compile_context>
chip_gen: v7x
topology: tpu7x:2x2x1
jax: 0.10.0
libtpu: 0.0.40
codegen_flags: <defaults>
</compile_context>

<pallas_src>
import numpy as np
import jax
import jax.numpy as jnp
from jax import lax
from jax.experimental import pallas as pl
from jax.experimental.pallas import tpu as pltpu


_LOG10 = np.float32(np.log(10.0))


def _round_up(x, m):
    return ((x + m - 1) // m) * m


def _cdiv(a, b):
    return -(-a // b)


# ------------------------------ one-time Pallas kernels ------------------------------


def _mel_to_mag_kernel(mel_ref, basis_ref, mag_ref):
    # mag_packed = (10 ** mel) @ basis_packed     (time-major, packed-real lanes)
    # Kept f32: one-time matmul outside the GL loop, and mag is the fixed target.
    lin = jnp.exp(mel_ref[...] * _LOG10)
    mag_ref[...] = jnp.dot(lin, basis_ref[...], preferred_element_type=jnp.float32)


def _istft_kernel(x_ref, syn_ref, fr_ref):
    # frames = X_packed @ synthesis  (hermitian inverse rDFT + synthesis hann folded in)
    fr_ref[...] = jnp.dot(x_ref[...], syn_ref[...], preferred_element_type=jnp.float32)


# ------------------------------- module port ---------------------------------


def _mel_filterbank(sr, n_fft, n_mels, fmin=0.0, fmax=None):
    # Deterministic triangular (HTK-style) mel filterbank.
    # TODO(synk): librosa.filters.mel uses Slaney mel scale + slaney norm;
    # this is a deterministic synthetic substitute (no checkpoint to match).
    fmax = float(sr) / 2.0 if fmax is None else float(fmax)
    n_freq = n_fft // 2 + 1

    def hz_to_mel(f):
        return 2595.0 * np.log10(1.0 + np.asarray(f, np.float64) / 700.0)

    def mel_to_hz(m):
        return 700.0 * (10.0 ** (np.asarray(m, np.float64) / 2595.0) - 1.0)

    mel_pts = np.linspace(hz_to_mel(fmin), hz_to_mel(fmax), n_mels + 2)
    hz_pts = mel_to_hz(mel_pts)
    fft_freqs = np.linspace(0.0, sr / 2.0, n_freq)
    fb = np.zeros((n_mels, n_freq), np.float64)
    for m in range(n_mels):
        lo, ce, hi = hz_pts[m], hz_pts[m + 1], hz_pts[m + 2]
        left = (fft_freqs - lo) / max(ce - lo, 1e-8)
        right = (hi - fft_freqs) / max(hi - ce, 1e-8)
        fb[m] = np.maximum(0.0, np.minimum(left, right))
    return fb.astype(np.float32)


class Mel2Audio:
    def __init__(self, n_fft=1024, hop_length=64, win_length=1024,
                 sampling_rate=16000, n_mel_channels=80,
                 mel_fmin=0.0, mel_fmax=None, n_iter=300):
        assert win_length == n_fft, "TODO(synk): window padding for win_length != n_fft"
        assert n_fft % 2 == 0, "packed-real layout assumes even n_fft"
        assert n_fft % hop_length == 0, "band-shift overlap-add assumes hop | n_fft"
        self.n_fft = n_fft
        self.hop_length = hop_length
        self.win_length = win_length
        self.sampling_rate = sampling_rate
        self.n_mels = n_mel_channels
        self.n_freq = n_fft // 2 + 1
        self.half = n_fft // 2
        self.n_iter = n_iter
        self.n_bands = n_fft // hop_length

        # halo (frames) needed on each side of a T tile for OLA + re-framing,
        # rounded to a multiple of 16 so bf16 VMEM stores stay sublane-aligned
        self.HA = _round_up(max(self.n_bands - 1, 1), 16)

        # lane width of the mel input, padded to a multiple of 128
        self.Mp = _round_up(self.n_mels, 128)

        # ---- generation-aware tiling / VMEM budget (v5e/v6e: 128 MiB, v7x: 64 MiB) ----
        try:
            vmem_cap = int(pltpu.get_tpu_info().vmem_capacity_bytes)
        except Exception:
            vmem_cap = 64 * 1024 * 1024
        if vmem_cap >= 100 * 1024 * 1024:        # v5e / v6e
            self.tile_max = 1024
            vmem_limit = 96 * 1024 * 1024
        else:                                    # v7x (64 MiB per core) or unknown
            self.tile_max = 512
            vmem_limit = 48 * 1024 * 1024
        self._cp = pltpu.CompilerParams(
            dimension_semantics=("parallel",),   # split the T grid across v7x cores
            vmem_limit_bytes=vmem_limit,
        )

        # ----- deterministic parameters (synthetic init, built in-script) -----
        half = self.half
        fb = _mel_filterbank(sampling_rate, n_fft, n_mel_channels, mel_fmin, mel_fmax)
        inv_mel = np.linalg.pinv(fb)                           # (n_freq, n_mels)
        basis = np.zeros((self.Mp, n_fft), np.float32)         # packed-real columns
        basis[:self.n_mels, :half + 1] = inv_mel.T
        basis[:self.n_mels, half + 1:] = inv_mel.T[:, 1:half]  # duplicate mag at Im slots
        self.inv_mel_T = jnp.asarray(basis)                    # f32 (one-time matmul)

        n = np.arange(n_fft)
        ang = 2.0 * np.pi * np.outer(n, np.arange(half + 1)) / n_fft   # (n_fft, half+1)
        cosm = np.cos(ang)
        sinm = np.sin(ang)
        # periodic (fftbins=True) hann window, as librosa uses by default
        win = 0.5 - 0.5 * np.cos(2.0 * np.pi * n / n_fft)
        self._win_np = win.astype(np.float32)

        # analysis matrix (n_fft, n_fft), packed-real columns, analysis hann folded in
        analysis = np.zeros((n_fft, n_fft), np.float64)
        analysis[:, :half + 1] = win[:, None] * cosm
        analysis[:, half + 1:] = -(win[:, None] * sinm[:, 1:half])
        # bf16 MXU inputs; Griffin-Lim is an approximate iterative algorithm, the
        # accumulated bf16 rounding of the DFT matrices is accepted for speed.
        self.analysis = jnp.asarray(analysis.astype(np.float32), dtype=jnp.bfloat16)

        # synthesis matrix (n_fft, n_fft): hermitian inverse rDFT + synthesis hann
        c = np.full(half + 1, 2.0 / n_fft)
        c[0] = 1.0 / n_fft
        c[half] = 1.0 / n_fft                                  # even n_fft Nyquist bin
        synthesis = np.zeros((n_fft, n_fft), np.float64)
        synthesis[:half + 1, :] = (c[:, None] * cosm.T) * win[None, :]
        synthesis[half + 1:, :] = -(c[1:half, None] * sinm.T[1:half, :]) * win[None, :]
        self.synthesis = jnp.asarray(synthesis.astype(np.float32), dtype=jnp.bfloat16)

    # ------------------------------ helpers ------------------------------

    def _tiling(self, T):
        # Pick tile from (near-)divisors of round_up(T, 16) so the tail never
        # wastes a whole tile of MXU work; keep >= 2 grid steps when there is
        # enough work so 'parallel' actually splits across v7x cores.
        T16 = _round_up(max(int(T), 16), 16)
        nt = max(1, _cdiv(T16, self.tile_max))
        if nt == 1 and T16 >= 256:
            nt = 2
        tile = max(_round_up(_cdiv(T16, nt), 16), self.HA)
        return tile, nt, tile * nt

    def _inv_wsum_np(self, T, T_pad):
        # 1 / window-sum-square, precomputed ONCE (true T frames only so padded
        # silent frames do not perturb the tail normalization)
        H, B = self.hop_length, self.n_bands
        win2 = self._win_np.astype(np.float64) ** 2
        wsum = np.zeros((T_pad + B - 1, H), np.float64)
        for b in range(B):
            wsum[b:b + T, :] += win2[b * H:(b + 1) * H][None, :]
        return np.where(wsum > 1e-10, 1.0 / np.maximum(wsum, 1e-10), 1.0).astype(np.float32)

    def _wsum_slabs_np(self, inv_wsum, tile, nt, NYR):
        # per-tile overlapped slabs of inv_wsum so the fused kernel reads them
        # with a plain BlockSpec (no halo logic for this tiny constant)
        H = self.hop_length
        padded = np.ones((nt * tile + NYR, H), np.float32)
        padded[:inv_wsum.shape[0]] = inv_wsum
        return np.stack([padded[i * tile:i * tile + NYR] for i in range(nt)], axis=0)

    # ----------------------- fused Griffin-Lim iteration -----------------------

    def _make_gl_kernel(self, tile):
        n_fft = self.n_fft
        H = self.hop_length
        B = self.n_bands
        HA = self.HA
        NYR = tile + HA                 # local waveform rows produced per tile
        half = self.half

        def kernel(xc_ref, mag_ref, wsum_ref, syn_ref, ana_ref, x_hbm_ref,
                   xout_ref, xbuf, sem):
            i = pl.program_id(0)
            nt = pl.num_programs(0)
            t0 = i * tile

            def top_cp():
                return pltpu.make_async_copy(
                    x_hbm_ref.at[pl.ds(t0 - HA, HA), :],
                    xbuf.at[pl.ds(0, HA), :], sem.at[0])

            def bot_cp():
                return pltpu.make_async_copy(
                    x_hbm_ref.at[pl.ds(t0 + tile, HA), :],
                    xbuf.at[pl.ds(HA + tile, HA), :], sem.at[1])

            # ---- assemble [top halo | central tile | bottom halo] of X in VMEM ----
            @pl.when(i > 0)
            def _():
                top_cp().start()

            @pl.when(i == 0)
            def _():
                xbuf[0:HA, :] = jnp.zeros((HA, n_fft), xbuf.dtype)

            @pl.when(i < nt - 1)
            def _():
                bot_cp().start()

            @pl.when(i == nt - 1)
            def _():
                xbuf[HA + tile:, :] = jnp.zeros((HA, n_fft), xbuf.dtype)

            xbuf[HA:HA + tile, :] = xc_ref[...]          # auto-pipelined central block

            @pl.when(i > 0)
            def _():
                top_cp().wait()

            @pl.when(i < nt - 1)
            def _():
                bot_cp().wait()

            # ---- ISTFT matmul (synthesis hann folded in), bf16 in / f32 accumulate ----
            fr = jnp.dot(xbuf[...], syn_ref[...], preferred_element_type=jnp.float32)

            # ---- overlap-add into the local waveform strip (global rows t0..t0+NYR) ----
            # y[j, r] = sum_b fr[HA + j - b, b*H + r]
            y = fr[HA:HA + NYR, 0:H]
            for b in range(1, B):
                y = y + fr[HA - b:HA - b + NYR, b * H:(b + 1) * H]
            y = y * wsum_ref[0]                          # 1 / window-sum-square

            # ---- re-frame the normalized waveform for the analysis transform ----
            f2 = jnp.concatenate([y[b:b + tile, :] for b in range(B)], axis=1)

            # ---- STFT matmul (analysis hann folded in) + GL phase projection ----
            est = jnp.dot(f2.astype(jnp.bfloat16), ana_ref[...],
                          preferred_element_type=jnp.float32)
            sq = est * est
            s = sq[:, :half] + sq[:, half:]              # |est|^2 per frequency bin
            sumsq = jnp.concatenate([s, s], axis=1)
            lane = lax.broadcasted_iota(jnp.int32, (tile, n_fft), 1)
            # DC and Nyquist bins are purely real: do not mix them with each other
            sumsq = jnp.where((lane == 0) | (lane == half), sq, sumsq)
            # X = mag * est / max(1e-8, |est|) == mag * est * rsqrt(max(1e-16, |est|^2))
            scale = mag_ref[...].astype(jnp.float32) * lax.rsqrt(
                jnp.maximum(np.float32(1e-16), sumsq))
            xout_ref[...] = (est * scale).astype(xout_ref.dtype)

        return kernel

    def _gl_step(self, X, mag_bf16, wsum_slabs, T_pad, tile, nt):
        n_fft = self.n_fft
        NYR = tile + self.HA
        return pl.pallas_call(
            self._make_gl_kernel(tile),
            grid=(nt,),
            in_specs=[
                pl.BlockSpec((tile, n_fft), lambda i: (i, 0)),             # X (central)
                pl.BlockSpec((tile, n_fft), lambda i: (i, 0)),             # mag (packed)
                pl.BlockSpec((1, NYR, self.hop_length), lambda i: (i, 0, 0)),  # inv_wsum
                pl.BlockSpec((n_fft, n_fft), lambda i: (0, 0)),            # synthesis
                pl.BlockSpec((n_fft, n_fft), lambda i: (0, 0)),            # analysis
                pl.BlockSpec(memory_space=pl.ANY),                         # X (halo DMA)
            ],
            out_specs=pl.BlockSpec((tile, n_fft), lambda i: (i, 0)),
            out_shape=jax.ShapeDtypeStruct((T_pad, n_fft), jnp.bfloat16),
            scratch_shapes=[pltpu.VMEM((tile + 2 * self.HA, n_fft), jnp.bfloat16),
                            pltpu.SemaphoreType.DMA((2,))],
            compiler_params=self._cp,
        )(X, mag_bf16, wsum_slabs, self.synthesis, self.analysis, X)

    # --------------------------- one-time Pallas wrappers ---------------------------

    def _mel_to_mag(self, mel_T, T_pad, tile, nt):
        return pl.pallas_call(
            _mel_to_mag_kernel,
            grid=(nt,),
            in_specs=[pl.BlockSpec((tile, self.Mp), lambda i: (i, 0)),
                      pl.BlockSpec((self.Mp, self.n_fft), lambda i: (0, 0))],
            out_specs=pl.BlockSpec((tile, self.n_fft), lambda i: (i, 0)),
            out_shape=jax.ShapeDtypeStruct((T_pad, self.n_fft), jnp.float32),
            compiler_params=self._cp,
        )(mel_T, self.inv_mel_T)

    def _istft_frames(self, X, T_pad, tile, nt):
        return pl.pallas_call(
            _istft_kernel,
            grid=(nt,),
            in_specs=[pl.BlockSpec((tile, self.n_fft), lambda i: (i, 0)),
                      pl.BlockSpec((self.n_fft, self.n_fft), lambda i: (0, 0))],
            out_specs=pl.BlockSpec((tile, self.n_fft), lambda i: (i, 0)),
            out_shape=jax.ShapeDtypeStruct((T_pad, self.n_fft), jnp.float32),
            compiler_params=self._cp,
        )(X, self.synthesis)

    def _overlap_add(self, frames, T_pad, inv_wsum):
        # final overlap-add (runs ONCE, outside the GL loop): dense band shifts
        H, B = self.hop_length, self.n_bands
        y = jnp.zeros((T_pad + B - 1, H), jnp.float32)
        for b in range(B):
            y = y.at[b:b + T_pad, :].add(frames[:, b * H:(b + 1) * H])
        return y * inv_wsum

    # -------------------------------- forward --------------------------------

    def forward(self, mel):
        mel = mel.astype(jnp.float32)                      # (n_mels, T)
        n_mels, T = mel.shape
        assert n_mels == self.n_mels
        tile, nt, T_pad = self._tiling(T)
        NYR = tile + self.HA
        n_fft, half = self.n_fft, self.half

        # time-major, padded mel; padded T rows masked out of mag so the padded
        # frames stay exactly silent through every Griffin-Lim iteration.
        mel_T = jnp.zeros((T_pad, self.Mp), jnp.float32).at[:T, :n_mels].set(mel.T)
        mag = self._mel_to_mag(mel_T, T_pad, tile, nt)     # (T_pad, n_fft) packed f32
        # NOTE: pinv reconstruction can be negative; the numpy reference does not
        # clamp, so we keep it unclamped to match forward semantics.
        mag = jnp.where((jnp.arange(T_pad) < T)[:, None], mag, 0.0)
        mag_bf16 = mag.astype(jnp.bfloat16)

        # zero-phase init: Re = mag, Im = 0 (Im slots are lanes > half)
        lane = jnp.arange(n_fft)
        X0 = jnp.where((lane > half)[None, :], 0.0, mag).astype(jnp.bfloat16)

        inv_wsum_np = self._inv_wsum_np(T, T_pad)          # numpy constant, hoisted
        wsum_slabs = jnp.asarray(self._wsum_slabs_np(inv_wsum_np, tile, nt, NYR))
        inv_wsum = jnp.asarray(inv_wsum_np)

        def gl_iter(_, X):
            return self._gl_step(X, mag_bf16, wsum_slabs, T_pad, tile, nt)

        X = lax.fori_loop(0, self.n_iter, gl_iter, X0)

        # final inversion (once): ISTFT kernel + plain-JAX overlap-add
        frames = self._istft_frames(X, T_pad, tile, nt)
        y2d = self._overlap_add(frames, T_pad, inv_wsum)
        L = self.n_fft + self.hop_length * (T - 1)
        return y2d.reshape(-1)[:L]


# ----------------------------------- main -------------------------------------

if __name__ == "__main__":
    n_mels, T = 16, 8
    model = Mel2Audio(n_fft=128, hop_length=32, win_length=128,
                      sampling_rate=16000, n_mel_channels=n_mels, n_iter=300)

    key = jax.random.PRNGKey(0)
    mel = 0.3 * jax.random.normal(key, (n_mels, T), dtype=jnp.float32)

    wav = jax.jit(model.forward)(mel)
    wav = jax.block_until_ready(wav)

    expected_len = model.n_fft + model.hop_length * (T - 1)
    assert wav.shape == (expected_len,), wav.shape
    assert bool(jnp.all(jnp.isfinite(wav)))
    print("KERNEL_OK")
</pallas_src>

<mosaic_0001>
module attributes {stable_mosaic.version = 11 : i64} {
  func.func @_mel_to_mag_kernel(%arg0: i32, %arg1: memref<16x128xf32, #tpu.memory_space<vmem>>, %arg2: memref<128x128xf32, #tpu.memory_space<vmem>>, %arg3: memref<16x128xf32, #tpu.memory_space<vmem>>) attributes {dimension_semantics = [#tpu.dimension_semantics<parallel>], iteration_bounds = array<i64: 1>, scalar_prefetch = 0 : i64, scratch_operands = 0 : i64, tpu.core_type = #tpu.core_type<tc>, window_params = [{transform_indices = @transform_0, window_bounds = array<i64: 16, 128>}, {pipeline_mode = #tpu.pipeline_mode<synchronous>, transform_indices = @transform_1, window_bounds = array<i64: 128, 128>}, {transform_indices = @transform_2, window_bounds = array<i64: 16, 128>}]} {
    %c0 = arith.constant 0 : index
    %c0_0 = arith.constant 0 : index
    %0 = vector.load %arg1[%c0, %c0_0] : memref<16x128xf32, #tpu.memory_space<vmem>>, vector<16x128xf32>
    %cst = arith.constant 2.30258512 : f32
    %1 = vector.broadcast %cst : f32 to vector<16x128xf32>
    %2 = arith.mulf %0, %1 : vector<16x128xf32>
    %3 = math.exp %2 : vector<16x128xf32>
    %c0_1 = arith.constant 0 : index
    %c0_2 = arith.constant 0 : index
    %4 = vector.load %arg2[%c0_1, %c0_2] : memref<128x128xf32, #tpu.memory_space<vmem>>, vector<128x128xf32>
    %cst_3 = arith.constant dense<0.000000e+00> : vector<16x128xf32>
    %5 = tpu.matmul %3, %4, %cst_3 {dimension_numbers = #tpu.dot_dimension_numbers<[1], [0], [0], [1], [0, 0, 1, 1], [], []>} : vector<16x128xf32>, vector<128x128xf32>, vector<16x128xf32> -> vector<16x128xf32>
    %c0_4 = arith.constant 0 : index
    %c0_5 = arith.constant 0 : index
    %6 = vector.load %arg3[%c0_4, %c0_5] : memref<16x128xf32, #tpu.memory_space<vmem>>, vector<16x128xf32>
    tpu.vector_store %arg3[%c0_4, %c0_5], %5 {strides = array<i32>} : memref<16x128xf32, #tpu.memory_space<vmem>>, vector<16x128xf32>,
    return
  }
  func.func @transform_0(%arg0: i32) -> (i32, i32) {
    %c0_i32 = arith.constant 0 : i32
    %c0_i32_0 = arith.constant 0 : i32
    return %arg0, %c0_i32 : i32, i32
  }
  func.func @transform_1(%arg0: i32) -> (i32, i32) {
    %c0_i32 = arith.constant 0 : i32
    %c0_i32_0 = arith.constant 0 : i32
    %c0_i32_1 = arith.constant 0 : i32
    return %c0_i32, %c0_i32_0 : i32, i32
  }
  func.func @transform_2(%arg0: i32) -> (i32, i32) {
    %c0_i32 = arith.constant 0 : i32
    %c0_i32_0 = arith.constant 0 : i32
    return %arg0, %c0_i32 : i32, i32
  }
}

module attributes {stable_mosaic.version = 11 : i64} {
  func.func @kernel(%arg0: i32, %arg1: memref<16x128xbf16, #tpu.memory_space<vmem>>, %arg2: memref<16x128xbf16, #tpu.memory_space<vmem>>, %arg3: memref<1x32x32xf32, #tpu.memory_space<vmem>>, %arg4: memref<128x128xbf16, #tpu.memory_space<vmem>>, %arg5: memref<128x128xbf16, #tpu.memory_space<vmem>>, %arg6: memref<16x128xbf16, #tpu.memory_space<any>>, %arg7: memref<16x128xbf16, #tpu.memory_space<vmem>>, %arg8: memref<48x128xbf16, #tpu.memory_space<vmem>>, %arg9: memref<2x!tpu.dma_semaphore, #tpu.memory_space<semaphore_mem>>) attributes {dimension_semantics = [#tpu.dimension_semantics<parallel>], iteration_bounds = array<i64: 1>, scalar_prefetch = 0 : i64, scratch_operands = 2 : i64, tpu.core_type = #tpu.core_type<tc>, window_params = [{transform_indices = @transform_0, window_bounds = array<i64: 16, 128>}, {transform_indices = @transform_1, window_bounds = array<i64: 16, 128>}, {transform_indices = @transform_2, window_bounds = array<i64: 1, 32, 32>}, {pipeline_mode = #tpu.pipeline_mode<synchronous>, transform_indices = @transform_3, window_bounds = array<i64: 128, 128>}, {pipeline_mode = #tpu.pipeline_mode<synchronous>, transform_indices = @transform_4, window_bounds = array<i64: 128, 128>}, {}, {transform_indices = @transform_6, window_bounds = array<i64: 16, 128>}]} {
    %c16_i32 = arith.constant 16 : i32
    %0 = arith.muli %arg0, %c16_i32 : i32
    %c0_i32 = arith.constant 0 : i32
    %1 = arith.cmpi sgt, %arg0, %c0_i32 : i32
    %2 = arith.extui %1 : i1 to i32
    %c0_i32_0 = arith.constant 0 : i32
    %3 = arith.cmpi ne, %2, %c0_i32_0 : i32
    scf.if %3 {
      %c16_i32_29 = arith.constant 16 : i32
      %63 = arith.subi %0, %c16_i32_29 : i32
      %c0_i32_30 = arith.constant 0 : i32
      %c0_i32_31 = arith.constant 0 : i32
      %64 = tpu.memref_slice %arg6[%63, %c0_i32_31] : memref<16x128xbf16, #tpu.memory_space<any>> -> memref<16x128xbf16, #tpu.memory_space<any>>
      %c0_i32_32 = arith.constant 0 : i32
      %c0_i32_33 = arith.constant 0 : i32
      %65 = tpu.memref_slice %arg8[%c0_i32_32, %c0_i32_33] : memref<48x128xbf16, #tpu.memory_space<vmem>> -> memref<16x128xbf16, #tpu.memory_space<vmem>>
      %66 = tpu.memref_slice %arg9[%c0_i32_30] : memref<2x!tpu.dma_semaphore, #tpu.memory_space<semaphore_mem>> -> memref<1x!tpu.dma_semaphore, #tpu.memory_space<semaphore_mem>>
      %67 = tpu.memref_squeeze %66 : memref<1x!tpu.dma_semaphore, #tpu.memory_space<semaphore_mem>> -> memref<!tpu.dma_semaphore, #tpu.memory_space<semaphore_mem>>
      tpu.enqueue_dma source(%64 : memref<16x128xbf16, #tpu.memory_space<any>>) target(%65 : memref<16x128xbf16, #tpu.memory_space<vmem>>) target_semaphore(%67 : memref<!tpu.dma_semaphore, #tpu.memory_space<semaphore_mem>>)
    } else {
    }
    %c0_i32_1 = arith.constant 0 : i32
    %4 = arith.cmpi eq, %arg0, %c0_i32_1 : i32
    %5 = arith.extui %4 : i1 to i32
    %c0_i32_2 = arith.constant 0 : i32
    %6 = arith.cmpi ne, %5, %c0_i32_2 : i32
    scf.if %6 {
      %cst_29 = arith.constant 0.000000e+00 : bf16
      %63 = vector.broadcast %cst_29 : bf16 to vector<16x128xbf16>
      %c0_30 = arith.constant 0 : index
      %c0_31 = arith.constant 0 : index
      %64 = vector.load %arg8[%c0_30, %c0_31] : memref<48x128xbf16, #tpu.memory_space<vmem>>, vector<16x128xbf16>
      tpu.vector_store %arg8[%c0_30, %c0_31], %63 {strides = array<i32>} : memref<48x128xbf16, #tpu.memory_space<vmem>>, vector<16x128xbf16>,
    } else {
    }
    %c0_i32_3 = arith.constant 0 : i32
    %7 = arith.cmpi slt, %arg0, %c0_i32_3 : i32
    %8 = arith.extui %7 : i1 to i32
    %c0_i32_4 = arith.constant 0 : i32
    %9 = arith.cmpi ne, %8, %c0_i32_4 : i32
    scf.if %9 {
      %c16_i32_29 = arith.constant 16 : i32
      %63 = arith.addi %0, %c16_i32_29 : i32
      %c1_i32 = arith.constant 1 : i32
      %c0_i32_30 = arith.constant 0 : i32
      %64 = tpu.memref_slice %arg6[%63, %c0_i32_30] : memref<16x128xbf16, #tpu.memory_space<any>> -> memref<16x128xbf16, #tpu.memory_space<any>>
      %c32_i32 = arith.constant 32 : i32
      %c0_i32_31 = arith.constant 0 : i32
      %65 = tpu.memref_slice %arg8[%c32_i32, %c0_i32_31] : memref<48x128xbf16, #tpu.memory_space<vmem>> -> memref<16x128xbf16, #tpu.memory_space<vmem>>
      %66 = tpu.memref_slice %arg9[%c1_i32] : memref<2x!tpu.dma_semaphore, #tpu.memory_space<semaphore_mem>> -> memref<1x!tpu.dma_semaphore, #tpu.memory_space<semaphore_mem>>
      %67 = tpu.memref_squeeze %66 : memref<1x!tpu.dma_semaphore, #tpu.memory_space<semaphore_mem>> -> memref<!tpu.dma_semaphore, #tpu.memory_space<semaphore_mem>>
      tpu.enqueue_dma source(%64 : memref<16x128xbf16, #tpu.memory_space<any>>) target(%65 : memref<16x128xbf16, #tpu.memory_space<vmem>>) target_semaphore(%67 : memref<!tpu.dma_semaphore, #tpu.memory_space<semaphore_mem>>)
    } else {
    }
    %c0_i32_5 = arith.constant 0 : i32
    %10 = arith.cmpi eq, %arg0, %c0_i32_5 : i32
    %11 = arith.extui %10 : i1 to i32
    %c0_i32_6 = arith.constant 0 : i32
    %12 = arith.cmpi ne, %11, %c0_i32_6 : i32
    scf.if %12 {
      %cst_29 = arith.constant 0.000000e+00 : bf16
      %63 = vector.broadcast %cst_29 : bf16 to vector<16x128xbf16>
      %c32 = arith.constant 32 : index
      %c0_30 = arith.constant 0 : index
      %64 = vector.load %arg8[%c32, %c0_30] : memref<48x128xbf16, #tpu.memory_space<vmem>>, vector<16x128xbf16>
      tpu.vector_store %arg8[%c32, %c0_30], %63 {strides = array<i32>} : memref<48x128xbf16, #tpu.memory_space<vmem>>, vector<16x128xbf16>,
    } else {
    }
    %c0 = arith.constant 0 : index
    %c0_7 = arith.constant 0 : index
    %13 = vector.load %arg1[%c0, %c0_7] : memref<16x128xbf16, #tpu.memory_space<vmem>>, vector<16x128xbf16>
    %c16 = arith.constant 16 : index
    %c0_8 = arith.constant 0 : index
    %14 = vector.load %arg8[%c16, %c0_8] : memref<48x128xbf16, #tpu.memory_space<vmem>>, vector<16x128xbf16>
    tpu.vector_store %arg8[%c16, %c0_8], %13 {strides = array<i32>} : memref<48x128xbf16, #tpu.memory_space<vmem>>, vector<16x128xbf16>,
    %c0_i32_9 = arith.constant 0 : i32
    %15 = arith.cmpi sgt, %arg0, %c0_i32_9 : i32
    %16 = arith.extui %15 : i1 to i32
    %c0_i32_10 = arith.constant 0 : i32
    %17 = arith.cmpi ne, %16, %c0_i32_10 : i32
    scf.if %17 {
      %c16_i32_29 = arith.constant 16 : i32
      %63 = arith.subi %0, %c16_i32_29 : i32
      %c0_i32_30 = arith.constant 0 : i32
      %c0_i32_31 = arith.constant 0 : i32
      %64 = tpu.memref_slice %arg6[%63, %c0_i32_31] : memref<16x128xbf16, #tpu.memory_space<any>> -> memref<16x128xbf16, #tpu.memory_space<any>>
      %c0_i32_32 = arith.constant 0 : i32
      %c0_i32_33 = arith.constant 0 : i32
      %65 = tpu.memref_slice %arg8[%c0_i32_32, %c0_i32_33] : memref<48x128xbf16, #tpu.memory_space<vmem>> -> memref<16x128xbf16, #tpu.memory_space<vmem>>
      %66 = tpu.memref_slice %arg9[%c0_i32_30] : memref<2x!tpu.dma_semaphore, #tpu.memory_space<semaphore_mem>> -> memref<1x!tpu.dma_semaphore, #tpu.memory_space<semaphore_mem>>
      %67 = tpu.memref_squeeze %66 : memref<1x!tpu.dma_semaphore, #tpu.memory_space<semaphore_mem>> -> memref<!tpu.dma_semaphore, #tpu.memory_space<semaphore_mem>>
      tpu.wait_dma2 semaphore(%67 : memref<!tpu.dma_semaphore, #tpu.memory_space<semaphore_mem>>) src(%64 : memref<16x128xbf16, #tpu.memory_space<any>>) dst(%65 : memref<16x128xbf16, #tpu.memory_space<vmem>>)
    } else {
    }
    %c0_i32_11 = arith.constant 0 : i32
    %18 = arith.cmpi slt, %arg0, %c0_i32_11 : i32
    %19 = arith.extui %18 : i1 to i32
    %c0_i32_12 = arith.constant 0 : i32
    %20 = arith.cmpi ne, %19, %c0_i32_12 : i32
    scf.if %20 {
      %c16_i32_29 = arith.constant 16 : i32
      %63 = arith.addi %0, %c16_i32_29 : i32
      %c1_i32 = arith.constant 1 : i32
      %c0_i32_30 = arith.constant 0 : i32
      %64 = tpu.memref_slice %arg6[%63, %c0_i32_30] : memref<16x128xbf16, #tpu.memory_space<any>> -> memref<16x128xbf16, #tpu.memory_space<any>>
      %c32_i32 = arith.constant 32 : i32
      %c0_i32_31 = arith.constant 0 : i32
      %65 = tpu.memref_slice %arg8[%c32_i32, %c0_i32_31] : memref<48x128xbf16, #tpu.memory_space<vmem>> -> memref<16x128xbf16, #tpu.memory_space<vmem>>
      %66 = tpu.memref_slice %arg9[%c1_i32] : memref<2x!tpu.dma_semaphore, #tpu.memory_space<semaphore_mem>> -> memref<1x!tpu.dma_semaphore, #tpu.memory_space<semaphore_mem>>
      %67 = tpu.memref_squeeze %66 : memref<1x!tpu.dma_semaphore, #tpu.memory_space<semaphore_mem>> -> memref<!tpu.dma_semaphore, #tpu.memory_space<semaphore_mem>>
      tpu.wait_dma2 semaphore(%67 : memref<!tpu.dma_semaphore, #tpu.memory_space<semaphore_mem>>) src(%64 : memref<16x128xbf16, #tpu.memory_space<any>>) dst(%65 : memref<16x128xbf16, #tpu.memory_space<vmem>>)
    } else {
    }
    %c0_13 = arith.constant 0 : index
    %c0_14 = arith.constant 0 : index
    %21 = vector.load %arg8[%c0_13, %c0_14] : memref<48x128xbf16, #tpu.memory_space<vmem>>, vector<48x128xbf16>
    %c0_15 = arith.constant 0 : index
    %c0_16 = arith.constant 0 : index
    %22 = vector.load %arg4[%c0_15, %c0_16] : memref<128x128xbf16, #tpu.memory_space<vmem>>, vector<128x128xbf16>
    %cst = arith.constant dense<0.000000e+00> : vector<48x128xf32>
    %23 = tpu.matmul %21, %22, %cst {dimension_numbers = #tpu.dot_dimension_numbers<[1], [0], [0], [1], [0, 0, 1, 1], [], []>} : vector<48x128xbf16>, vector<128x128xbf16>, vector<48x128xf32> -> vector<48x128xf32>
    %24 = vector.extract_strided_slice %23 {offsets = [16, 0], sizes = [32, 32], strides = [1, 1]} : vector<48x128xf32> to vector<32x32xf32>
    %25 = vector.extract_strided_slice %23 {offsets = [15, 32], sizes = [32, 32], strides = [1, 1]} : vector<48x128xf32> to vector<32x32xf32>
    %26 = arith.addf %24, %25 : vector<32x32xf32>
    %27 = vector.extract_strided_slice %23 {offsets = [14, 64], sizes = [32, 32], strides = [1, 1]} : vector<48x128xf32> to vector<32x32xf32>
    %28 = arith.addf %26, %27 : vector<32x32xf32>
    %29 = vector.extract_strided_slice %23 {offsets = [13, 96], sizes = [32, 32], strides = [1, 1]} : vector<48x128xf32> to vector<32x32xf32>
    %30 = arith.addf %28, %29 : vector<32x32xf32>
    %c0_17 = arith.constant 0 : index
    %c0_18 = arith.constant 0 : index
    %c0_19 = arith.constant 0 : index
    %31 = vector.load %arg3[%c0_17, %c0_18, %c0_19] : memref<1x32x32xf32, #tpu.memory_space<vmem>>, vector<1x32x32xf32>
    %32 = vector.shape_cast %31 : vector<1x32x32xf32> to vector<32x32xf32>
    %33 = arith.mulf %30, %32 : vector<32x32xf32>
    %34 = vector.extract_strided_slice %33 {offsets = [0, 0], sizes = [16, 32], strides = [1, 1]} : vector<32x32xf32> to vector<16x32xf32>
    %35 = vector.extract_strided_slice %33 {offsets = [1, 0], sizes = [16, 32], strides = [1, 1]} : vector<32x32xf32> to vector<16x32xf32>
    %36 = vector.extract_strided_slice %33 {offsets = [2, 0], sizes = [16, 32], strides = [1, 1]} : vector<32x32xf32> to vector<16x32xf32>
    %37 = vector.extract_strided_slice %33 {offsets = [3, 0], sizes = [16, 32], strides = [1, 1]} : vector<32x32xf32> to vector<16x32xf32>
    %38 = tpu.concatenate %34, %35, %36, %37 in 1 : vector<16x32xf32>, vector<16x32xf32>, vector<16x32xf32>, vector<16x32xf32> -> vector<16x128xf32>
    %39 = arith.truncf %38 : vector<16x128xf32> to vector<16x128xbf16>
    %c0_20 = arith.constant 0 : index
    %c0_21 = arith.constant 0 : index
    %40 = vector.load %arg5[%c0_20, %c0_21] : memref<128x128xbf16, #tpu.memory_space<vmem>>, vector<128x128xbf16>
    %cst_22 = arith.constant dense<0.000000e+00> : vector<16x128xf32>
    %41 = tpu.matmul %39, %40, %cst_22 {dimension_numbers = #tpu.dot_dimension_numbers<[1], [0], [0], [1], [0, 0, 1, 1], [], []>} : vector<16x128xbf16>, vector<128x128xbf16>, vector<16x128xf32> -> vector<16x128xf32>
    %42 = arith.mulf %41, %41 : vector<16x128xf32>
    %43 = vector.extract_strided_slice %42 {offsets = [0, 0], sizes = [16, 64], strides = [1, 1]} : vector<16x128xf32> to vector<16x64xf32>
    %44 = vector.extract_strided_slice %42 {offsets = [0, 64], sizes = [16, 64], strides = [1, 1]} : vector<16x128xf32> to vector<16x64xf32>
    %45 = arith.addf %43, %44 : vector<16x64xf32>
    %46 = tpu.concatenate %45, %45 in 1 : vector<16x64xf32>, vector<16x64xf32> -> vector<16x128xf32>
    %47 = tpu.iota {dimensions = array<i32: 1>} : vector<16x128xi32>
    %c0_i32_23 = arith.constant 0 : i32
    %48 = vector.broadcast %c0_i32_23 : i32 to vector<16x128xi32>
    %49 = arith.cmpi eq, %47, %48 : vector<16x128xi32>
    %c64_i32 = arith.constant 64 : i32
    %50 = vector.broadcast %c64_i32 : i32 to vector<16x128xi32>
    %51 = arith.cmpi eq, %47, %50 : vector<16x128xi32>
    %52 = arith.ori %49, %51 : vector<16x128xi1>
    %53 = arith.select %52, %42, %46 : vector<16x128xi1>, vector<16x128xf32>
    %c0_24 = arith.constant 0 : index
    %c0_25 = arith.constant 0 : index
    %54 = vector.load %arg2[%c0_24, %c0_25] : memref<16x128xbf16, #tpu.memory_space<vmem>>, vector<16x128xbf16>
    %55 = arith.extf %54 : vector<16x128xbf16> to vector<16x128xf32>
    %cst_26 = arith.constant 1.000000e-16 : f32
    %56 = vector.broadcast %cst_26 : f32 to vector<16x128xf32>
    %57 = arith.maximumf %56, %53 : vector<16x128xf32>
    %58 = math.rsqrt %57 : vector<16x128xf32>
    %59 = arith.mulf %55, %58 : vector<16x128xf32>
    %60 = arith.mulf %41, %59 : vector<16x128xf32>
    %61 = arith.truncf %60 : vector<16x128xf32> to vector<16x128xbf16>
    %c0_27 = arith.constant 0 : index
    %c0_28 = arith.constant 0 : index
    %62 = vector.load %arg7[%c0_27, %c0_28] : memref<16x128xbf16, #tpu.memory_space<vmem>>, vector<16x128xbf16>
    tpu.vector_store %arg7[%c0_27, %c0_28], %61 {strides = array<i32>} : memref<16x128xbf16, #tpu.memory_space<vmem>>, vector<16x128xbf16>,
    return
  }
  func.func @transform_0(%arg0: i32) -> (i32, i32) {
    %c0_i32 = arith.constant 0 : i32
    %c0_i32_0 = arith.constant 0 : i32
    return %arg0, %c0_i32 : i32, i32
  }
  func.func @transform_1(%arg0: i32) -> (i32, i32) {
    %c0_i32 = arith.constant 0 : i32
    %c0_i32_0 = arith.constant 0 : i32
    return %arg0, %c0_i32 : i32, i32
  }
  func.func @transform_2(%arg0: i32) -> (i32, i32, i32) {
    %c0_i32 = arith.constant 0 : i32
    %c0_i32_0 = arith.constant 0 : i32
    %c0_i32_1 = arith.constant 0 : i32
    return %arg0, %c0_i32, %c0_i32_0 : i32, i32, i32
  }
  func.func @transform_3(%arg0: i32) -> (i32, i32) {
    %c0_i32 = arith.constant 0 : i32
    %c0_i32_0 = arith.constant 0 : i32
    %c0_i32_1 = arith.constant 0 : i32
    return %c0_i32, %c0_i32_0 : i32, i32
  }
  func.func @transform_4(%arg0: i32) -> (i32, i32) {
    %c0_i32 = arith.constant 0 : i32
    %c0_i32_0 = arith.constant 0 : i32
    %c0_i32_1 = arith.constant 0 : i32
    return %c0_i32, %c0_i32_0 : i32, i32
  }
  func.func @transform_6(%arg0: i32) -> (i32, i32) {
    %c0_i32 = arith.constant 0 : i32
    %c0_i32_0 = arith.constant 0 : i32
    return %arg0, %c0_i32 : i32, i32
  }
}

module attributes {stable_mosaic.version = 11 : i64} {
  func.func @_istft_kernel(%arg0: i32, %arg1: memref<16x128xbf16, #tpu.memory_space<vmem>>, %arg2: memref<128x128xbf16, #tpu.memory_space<vmem>>, %arg3: memref<16x128xf32, #tpu.memory_space<vmem>>) attributes {dimension_semantics = [#tpu.dimension_semantics<parallel>], iteration_bounds = array<i64: 1>, scalar_prefetch = 0 : i64, scratch_operands = 0 : i64, tpu.core_type = #tpu.core_type<tc>, window_params = [{transform_indices = @transform_0, window_bounds = array<i64: 16, 128>}, {pipeline_mode = #tpu.pipeline_mode<synchronous>, transform_indices = @transform_1, window_bounds = array<i64: 128, 128>}, {transform_indices = @transform_2, window_bounds = array<i64: 16, 128>}]} {
    %c0 = arith.constant 0 : index
    %c0_0 = arith.constant 0 : index
    %0 = vector.load %arg1[%c0, %c0_0] : memref<16x128xbf16, #tpu.memory_space<vmem>>, vector<16x128xbf16>
    %c0_1 = arith.constant 0 : index
    %c0_2 = arith.constant 0 : index
    %1 = vector.load %arg2[%c0_1, %c0_2] : memref<128x128xbf16, #tpu.memory_space<vmem>>, vector<128x128xbf16>
    %cst = arith.constant dense<0.000000e+00> : vector<16x128xf32>
    %2 = tpu.matmul %0, %1, %cst {dimension_numbers = #tpu.dot_dimension_numbers<[1], [0], [0], [1], [0, 0, 1, 1], [], []>} : vector<16x128xbf16>, vector<128x128xbf16>, vector<16x128xf32> -> vector<16x128xf32>
    %c0_3 = arith.constant 0 : index
    %c0_4 = arith.constant 0 : index
    %3 = vector.load %arg3[%c0_3, %c0_4] : memref<16x128xf32, #tpu.memory_space<vmem>>, vector<16x128xf32>
    tpu.vector_store %arg3[%c0_3, %c0_4], %2 {strides = array<i32>} : memref<16x128xf32, #tpu.memory_space<vmem>>, vector<16x128xf32>,
    return
  }
  func.func @transform_0(%arg0: i32) -> (i32, i32) {
    %c0_i32 = arith.constant 0 : i32
    %c0_i32_0 = arith.constant 0 : i32
    return %arg0, %c0_i32 : i32, i32
  }
  func.func @transform_1(%arg0: i32) -> (i32, i32) {
    %c0_i32 = arith.constant 0 : i32
    %c0_i32_0 = arith.constant 0 : i32
    %c0_i32_1 = arith.constant 0 : i32
    return %c0_i32, %c0_i32_0 : i32, i32
  }
  func.func @transform_2(%arg0: i32) -> (i32, i32) {
    %c0_i32 = arith.constant 0 : i32
    %c0_i32_0 = arith.constant 0 : i32
    return %arg0, %c0_i32 : i32, i32
  }
}

</mosaic_0001>

<llo_original>
// kernel: forward.2
$region0: #{forward.2}
  #allocation0 [shape = 'u32[]', space=smem, size = 0x4, offset = 0x4, fixed_abs, tag = 'smem constant byte address 0x4 - core index']
  #allocation1 [shape = 'u32[144,128]{1,0:T(1,128)}', space=vmem, size = 0x12000, scoped, tag = 'internal scratch']
  %s0 = inlined_call_operand.vmem [shape: f32[16,128], index: 0, kind: input, shape index: {}]
  %s1 = inlined_call_operand.hbm [shape: f32[128,128], index: 1, kind: input, shape index: {}]
  %s2 = inlined_call_operand.vmem [shape: f32[16,128], index: 2, kind: output, shape index: {}]
  %s3 = sld [smem:[#allocation0]]
  $region22: #{forward.2} parent=0
    _
  %s5 = ssub.s32 1, %s3
  %s6 = scalar_select 0, %s5, %s3
  $region1: #{forward.2} parent=0
    #allocation2 [shape = 'u8[65536]{0}', space=vmem, size = 0x10000, scoped, tag = 'input window, operand 1, single buffered']
    #allocation3 [shape = 's32[1]{0}', space=sflag, size = 0x4, scoped, tag = 'scoped memory for forward.2']
    %7 = vsyncpa [#allocation3], 0
    // Predicated region
    $region2: #{forward.2} parent=1 // pred_check
      _
    $region3: #{forward.2} parent=1 // pred_check_branch
      %9 = sbr.rel (0) target = $region5
    $region4: #{forward.2} parent=1 // pred_region
      _
    $region5: #{forward.2} parent=1 // pred_fallthru
      _
    // Predicated region
    $region6: #{forward.2} parent=1 // pred_check
      _
    $region7: #{forward.2} parent=1 // pred_check_branch
      %11 = sbr.rel (0) target = $region9
    $region8: #{forward.2} parent=1 // pred_region
      %s13 = ssub.s32 2048, 2048
      %14 = vsyncadd [#allocation3], %s13
      %s15 = sshll.u32 [#allocation2], 4
      %s16 = int_to_ptr.vmem [resolvable:$true] %s15
      %21 = dma.hbm_to_vmem [thread:$0]  %s1, 2048, %s16, [#allocation3], 128, 128, 8
    $region9: #{forward.2} parent=1 // pred_fallthru
      _
    // Predicated region
    $region10: #{forward.2} parent=1 // pred_check
      _
    $region11: #{forward.2} parent=1 // pred_check_branch
      %23 = sbr.rel (0) target = $region13
    $region12: #{forward.2} parent=1 // pred_region
      %24 = dma.done [#allocation3], 2048
    $region13: #{forward.2} parent=1 // pred_fallthru
      _
    %v25 = vld [vmem:[%s0] sm:$0xff]
    %v26 = vld [vmem:[%s0 + $0x8] sm:$0xff]
    %v27 = vmul.f32 %v25, 2.3025851
    %v28 = vmul.f32 %v26, 2.3025851
    %v29 = vmul.f32 %v27, 1.442695
    %v30 = vpow.pop %v29
    %v31 = vmul.f32 %v28, 1.442695
    %v32 = vpow.pop %v31
    %v33 = vld [vmem:[#allocation2] sm:$0xff]
    %v34 = vld [vmem:[#allocation2 + $0x8] sm:$0xff]
    %v35 = vld [vmem:[#allocation2 + $0x10] sm:$0xff]
    %v36 = vld [vmem:[#allocation2 + $0x18] sm:$0xff]
    %v37 = vld [vmem:[#allocation2 + $0x20] sm:$0xff]
    %v38 = vld [vmem:[#allocation2 + $0x28] sm:$0xff]
    %v39 = vld [vmem:[#allocation2 + $0x30] sm:$0xff]
    %v40 = vld [vmem:[#allocation2 + $0x38] sm:$0xff]
    %v41 = vld [vmem:[#allocation2 + $0x40] sm:$0xff]
    %v42 = vld [vmem:[#allocation2 + $0x48] sm:$0xff]
    %v43 = vld [vmem:[#allocation2 + $0x50] sm:$0xff]
    %v44 = vld [vmem:[#allocation2 + $0x58] sm:$0xff]
    %v45 = vld [vmem:[#allocation2 + $0x60] sm:$0xff]
    %v46 = vld [vmem:[#allocation2 + $0x68] sm:$0xff]
    %v47 = vld [vmem:[#allocation2 + $0x70] sm:$0xff]
    %v48 = vld [vmem:[#allocation2 + $0x78] sm:$0xff]
    %49 = vmatprep.subr.mxu0 0.0
    %50 = vmatpush1.msra.mxu0 %v33
    %51 = vmatprep.subr.mxu0 0.0
    %52 = vmatpush1.msra.mxu0 %v34
    %53 = vmatprep.subr.mxu0 0.0
    %54 = vmatpush1.msra.mxu0 %v35
    %55 = vmatprep.subr.mxu0 0.0
    %56 = vmatpush1.msra.mxu0 %v36
    %57 = vmatprep.subr.mxu0 0.0
    %58 = vmatpush1.msra.mxu0 %v37
    %59 = vmatprep.subr.mxu0 0.0
    %60 = vmatpush1.msra.mxu0 %v38
    %61 = vmatprep.subr.mxu0 0.0
    %62 = vmatpush1.msra.mxu0 %v39
    %63 = vmatprep.subr.mxu0 0.0
    %64 = vmatpush1.msra.mxu0 %v40
    %65 = vmatprep.subr.mxu0 0.0
    %66 = vmatpush1.msra.mxu0 %v41
    %67 = vmatprep.subr.mxu0 0.0
    %68 = vmatpush1.msra.mxu0 %v42
    %69 = vmatprep.subr.mxu0 0.0
    %70 = vmatpush1.msra.mxu0 %v43
    %71 = vmatprep.subr.mxu0 0.0
    %72 = vmatpush1.msra.mxu0 %v44
    %73 = vmatprep.subr.mxu0 0.0
    %74 = vmatpush1.msra.mxu0 %v45
    %75 = vmatprep.subr.mxu0 0.0
    %76 = vmatpush1.msra.mxu0 %v46
    %77 = vmatprep.subr.mxu0 0.0
    %78 = vmatpush1.msra.mxu0 %v47
    %79 = vmatprep.subr.mxu0 0.0
    %80 = vmatpush1.msra.mxu0 %v48
    %81 = vmatprep.subr.mxu0 0.0
    %82 = vmatpush1.msra.mxu0 0.0
    %83 = vmatprep.subr.mxu0 0.0
    %84 = vmatpush1.msra.mxu0 0.0
    %85 = vmatprep.subr.mxu0 0.0
    %86 = vmatpush1.msra.mxu0 0.0
    %87 = vmatprep.subr.mxu0 0.0
    %88 = vmatpush1.msra.mxu0 0.0
    %89 = vmatprep.subr.mxu0 0.0
    %90 = vmatpush1.msra.mxu0 0.0
    %91 = vmatprep.subr.mxu0 0.0
    %92 = vmatpush1.msra.mxu0 0.0
    %93 = vmatprep.subr.mxu0 0.0
    %94 = vmatpush1.msra.mxu0 0.0
    %95 = vmatprep.subr.mxu0 0.0
    %96 = vmatpush1.msra.mxu0 0.0
    %97 = vmatprep.subr.mxu0 0.0
    %98 = vmatpush1.msra.mxu0 0.0
    %99 = vmatprep.subr.mxu0 0.0
    %100 = vmatpush1.msra.mxu0 0.0
    %101 = vmatprep.subr.mxu0 0.0
    %102 = vmatpush1.msra.mxu0 0.0
    %103 = vmatprep.subr.mxu0 0.0
    %104 = vmatpush1.msra.mxu0 0.0
    %105 = vmatprep.subr.mxu0 0.0
    %106 = vmatpush1.msra.mxu0 0.0
    %107 = vmatprep.subr.mxu0 0.0
    %108 = vmatpush1.msra.mxu0 0.0
    %109 = vmatprep.subr.mxu0 0.0
    %110 = vmatpush1.msra.mxu0 0.0
    %111 = vmatprep.subr.mxu0 0.0
    %112 = vmatpush1.msra.mxu0 0.0
    %113 = vmatprep.mubr.f32.mxu0 0.0
    %114 = vmatmul.mubr.f32.gmra.mrb[0].mxu0 %v30
    %v115 = vpop.f32.mrb[0].mxu0
    %v116 = vadd.f32 0.0, %v115
    %v117 = vpop.f32.mrb[0].mxu0
    %118 = vmatprep.mubr.f32.mxu0 0.0
    %119 = vmatmul.mubr.f32.gmra.mrb[0].mxu0 %v32
    %v120 = vpop.f32.mrb[0].mxu0
    %v121 = vadd.f32 0.0, %v120
    %v122 = vpop.f32.mrb[0].mxu0
    %123 = vdwg.mxu0
    %124 = vst [vmem:[%s2] sm:$0xff] %v116
    %125 = vst [vmem:[%s2 + $0x8] sm:$0xff] %v121
    // Predicated region
    $region14: #{forward.2} parent=1 // pred_check
      _
    $region15: #{forward.2} parent=1 // pred_check_branch
      %127 = sbr.rel (0) target = $region17
    $region16: #{forward.2} parent=1 // pred_region
      _
    $region17: #{forward.2} parent=1 // pred_fallthru
      _
    // Predicated region
    $region18: #{forward.2} parent=1 // pred_check
      _
    $region19: #{forward.2} parent=1 // pred_check_branch
      %129 = sbr.rel (0) target = $region21
    $region20: #{forward.2} parent=1 // pred_region
      _
    $region21: #{forward.2} parent=1 // pred_fallthru
      _
    %130 = vsyncpa [#allocation3], 1

// kernel: forward.3
$region0: #{forward.3}
  #allocation0 [shape = 'u32[]', space=smem, size = 0x4, offset = 0x4, fixed_abs, tag = 'smem constant byte address 0x4 - core index']
  #allocation1 [shape = 'u32[144,128]{1,0:T(1,128)}', space=vmem, size = 0x12000, scoped, tag = 'internal scratch']
  %s0 = inlined_call_operand.vmem [shape: bf16[16,128], index: 0, kind: input, shape index: {}]
  %s1 = inlined_call_operand.vmem [shape: bf16[128,128], index: 1, kind: input, shape index: {}]
  %s2 = inlined_call_operand.vmem [shape: f32[16,128], index: 2, kind: output, shape index: {}]
  %s3 = sld [smem:[#allocation0]]
  $region18: #{forward.3} parent=0
    _
  %s5 = ssub.s32 1, %s3
  %s6 = scalar_select 0, %s5, %s3
  // Predicated region
  $region2: #{forward.3} parent=0 // pred_check
    _
  $region3: #{forward.3} parent=0 // pred_check_branch
    %8 = sbr.rel (0) target = $region5
  $region4: #{forward.3} parent=0 // pred_region
    _
  $region5: #{forward.3} parent=0 // pred_fallthru
    _
  // Predicated region
  $region6: #{forward.3} parent=0 // pred_check
    _
  $region7: #{forward.3} parent=0 // pred_check_branch
    %10 = sbr.rel (0) target = $region9
  $region8: #{forward.3} parent=0 // pred_region
    _
  $region9: #{forward.3} parent=0 // pred_fallthru
    _
  %v12 = vld [vmem:[%s0] sm:$0xf]
  %v13 = vld [vmem:[%s0 + $0x4] sm:$0xf]
  %v14 = vld [vmem:[%s1] sm:$0xf]
  %v15 = vld [vmem:[%s1 + $0x4] sm:$0xf]
  %v16 = vld [vmem:[%s1 + $0x8] sm:$0xf]
  %v17 = vld [vmem:[%s1 + $0xc] sm:$0xf]
  %v18 = vld [vmem:[%s1 + $0x10] sm:$0xf]
  %v19 = vld [vmem:[%s1 + $0x14] sm:$0xf]
  %v20 = vld [vmem:[%s1 + $0x18] sm:$0xf]
  %v21 = vld [vmem:[%s1 + $0x1c] sm:$0xf]
  %v22 = vld [vmem:[%s1 + $0x20] sm:$0xf]
  %v23 = vld [vmem:[%s1 + $0x24] sm:$0xf]
  %v24 = vld [vmem:[%s1 + $0x28] sm:$0xf]
  %v25 = vld [vmem:[%s1 + $0x2c] sm:$0xf]
  %v26 = vld [vmem:[%s1 + $0x30] sm:$0xf]
  %v27 = vld [vmem:[%s1 + $0x34] sm:$0xf]
  %v28 = vld [vmem:[%s1 + $0x38] sm:$0xf]
  %v29 = vld [vmem:[%s1 + $0x3c] sm:$0xf]
  %v32 = vunpack.c.l.b16 %v12
  %v33 = vunpack.c.l.b16 %v13
  %v34 = vpack.c.b16 %v33, %v32
  %v52 = vunpack.c.l.b16 %v14
  %v53 = vunpack.c.l.b16 %v15
  %v54 = vunpack.c.l.b16 %v16
  %v55 = vunpack.c.l.b16 %v17
  %v56 = vunpack.c.l.b16 %v18
  %v57 = vunpack.c.l.b16 %v19
  %v58 = vunpack.c.l.b16 %v20
  %v59 = vunpack.c.l.b16 %v21
  %v60 = vunpack.c.l.b16 %v22
  %v61 = vunpack.c.l.b16 %v23
  %v62 = vunpack.c.l.b16 %v24
  %v63 = vunpack.c.l.b16 %v25
  %v64 = vunpack.c.l.b16 %v26
  %v65 = vunpack.c.l.b16 %v27
  %v66 = vunpack.c.l.b16 %v28
  %v67 = vunpack.c.l.b16 %v29
  %v68 = vpack.c.b16 %v53, %v52
  %v69 = vpack.c.b16 %v55, %v54
  %v70 = vpack.c.b16 %v57, %v56
  %v71 = vpack.c.b16 %v59, %v58
  %v72 = vpack.c.b16 %v61, %v60
  %v73 = vpack.c.b16 %v63, %v62
  %v74 = vpack.c.b16 %v65, %v64
  %v75 = vpack.c.b16 %v67, %v66
  %84 = vmatprep.subr.bf16.mxu0 0
  %85 = vmatpush1.bf16.msra.mxu0 %v68
  %86 = vmatprep.subr.bf16.mxu0 0
  %87 = vmatpush1.bf16.msra.mxu0 %v69
  %88 = vmatprep.subr.bf16.mxu0 0
  %89 = vmatpush1.bf16.msra.mxu0 %v70
  %90 = vmatprep.subr.bf16.mxu0 0
  %91 = vmatpush1.bf16.msra.mxu0 %v71
  %92 = vmatprep.subr.bf16.mxu0 0
  %93 = vmatpush1.bf16.msra.mxu0 %v72
  %94 = vmatprep.subr.bf16.mxu0 0
  %95 = vmatpush1.bf16.msra.mxu0 %v73
  %96 = vmatprep.subr.bf16.mxu0 0
  %97 = vmatpush1.bf16.msra.mxu0 %v74
  %98 = vmatprep.subr.bf16.mxu0 0
  %99 = vmatpush1.bf16.msra.mxu0 %v75
  %100 = vmatprep.subr.bf16.mxu0 0
  %101 = vmatpush1.bf16.msra.mxu0 0
  %102 = vmatprep.subr.bf16.mxu0 0
  %103 = vmatpush1.bf16.msra.mxu0 0
  %104 = vmatprep.subr.bf16.mxu0 0
  %105 = vmatpush1.bf16.msra.mxu0 0
  %106 = vmatprep.subr.bf16.mxu0 0
  %107 = vmatpush1.bf16.msra.mxu0 0
  %108 = vmatprep.subr.bf16.mxu0 0
  %109 = vmatpush1.bf16.msra.mxu0 0
  %110 = vmatprep.subr.bf16.mxu0 0
  %111 = vmatpush1.bf16.msra.mxu0 0
  %112 = vmatprep.subr.bf16.mxu0 0
  %113 = vmatpush1.bf16.msra.mxu0 0
  %114 = vmatprep.subr.bf16.mxu0 0
  %115 = vmatpush1.bf16.msra.mxu0 0
  %116 = vmatprep.mubr.bf16.mxu0 0
  %117 = vmatmul.mubr.bf16.gmra.mrb[0].mxu0 %v34
  %v118 = vpop.f32.mrb[0].mxu0
  %v119 = vadd.f32 0.0, %v118
  %v120 = vpop.f32.mrb[0].mxu0
  %v121 = vpop.f32.mrb[0].mxu0
  %v122 = vadd.f32 0.0, %v121
  %v123 = vpop.f32.mrb[0].mxu0
  %124 = vdwg.mxu0
  %125 = vst [vmem:[%s2] sm:$0xff] %v119
  %126 = vst [vmem:[%s2 + $0x8] sm:$0xff] %v122
  // Predicated region
  $region10: #{forward.3} parent=0 // pred_check
    _
  $region11: #{forward.3} parent=0 // pred_check_branch
    %128 = sbr.rel (0) target = $region13
  $region12: #{forward.3} parent=0 // pred_region
    _
  $region13: #{forward.3} parent=0 // pred_fallthru
    _
  // Predicated region
  $region14: #{forward.3} parent=0 // pred_check
    _
  $region15: #{forward.3} parent=0 // pred_check_branch
    %130 = sbr.rel (0) target = $region17
  $region16: #{forward.3} parent=0 // pred_region
    _
  $region17: #{forward.3} parent=0 // pred_fallthru
    _

// kernel: closed_call.4
$region0: #{closed_call.4}
  #allocation0 [shape = 'u32[]', space=smem, size = 0x4, offset = 0x4, fixed_abs, tag = 'smem constant byte address 0x4 - core index']
  #allocation1 [shape = 'u32[144,128]{1,0:T(1,128)}', space=vmem, size = 0x12000, scoped, tag = 'internal scratch']
  #allocation2 [shape = 'bf16[48,128]{1,0:T(16,128)(2,1)}', space=vmem, size = 0x3000, scoped, tag = 'scratch operand']
  #allocation3 [shape = 's32[2]{0}', space=sflag, size = 0x8, scoped, tag = 'scratch operand']
  #allocation4 [shape = 's32[]', space=sflag, size = 0x4, offset = 0, fixed_abs, tag = 'sflag constant byte address 0x0 - dummy sync flag']
  #allocation5 [shape = 's32[]', space=sflag, size = 0x4, offset = 0, fixed_abs, tag = 'sflag constant byte address 0x0 - dummy sync flag']
  %s0 = inlined_call_operand.vmem [shape: bf16[16,128], index: 0, kind: input, shape index: {}, may-alias: {0,5}]
  %s1 = inlined_call_operand.vmem [shape: bf16[16,128], index: 1, kind: input, shape index: {}]
  %s2 = inlined_call_operand.vmem [shape: f32[1,32,32], index: 2, kind: input, shape index: {}]
  %s3 = inlined_call_operand.vmem [shape: bf16[128,128], index: 3, kind: input, shape index: {}]
  %s4 = inlined_call_operand.vmem [shape: bf16[128,128], index: 4, kind: input, shape index: {}]
  %s5 = inlined_call_operand.vmem [shape: bf16[16,128], index: 5, kind: input, shape index: {}, may-alias: {0,5}]
  %s6 = inlined_call_operand.vmem [shape: bf16[16,128], index: 6, kind: output, shape index: {}]
  %s7 = sld [smem:[#allocation0]]
  $region122: #{closed_call.4} parent=0
    _
  %s9 = ssub.s32 1, %s7
  %s10 = scalar_select 0, %s9, %s7
  // Predicated region
  $region2: #{closed_call.4} parent=0 // pred_check
    _
  $region3: #{closed_call.4} parent=0 // pred_check_branch
    %12 = sbr.rel (0) target = $region5
  $region4: #{closed_call.4} parent=0 // pred_region
    _
  $region5: #{closed_call.4} parent=0 // pred_fallthru
    _
  // Predicated region
  $region6: #{closed_call.4} parent=0 // pred_check
    _
  $region7: #{closed_call.4} parent=0 // pred_check_branch
    %14 = sbr.rel (0) target = $region9
  $region8: #{closed_call.4} parent=0 // pred_region
    _
  $region9: #{closed_call.4} parent=0 // pred_fallthru
    _
  // Predicated region
  $region10: #{closed_call.4} parent=0 // pred_check
    _
  $region11: #{closed_call.4} parent=0 // pred_check_branch
    %16 = sbr.rel (0) target = $region13
  $region12: #{closed_call.4} parent=0 // pred_region
    _
  $region13: #{closed_call.4} parent=0 // pred_fallthru
    _
  // Predicated region
  $region14: #{closed_call.4} parent=0 // pred_check
    _
  $region15: #{closed_call.4} parent=0 // pred_check_branch
    %18 = sbr.rel (0) target = $region17
  $region16: #{closed_call.4} parent=0 // pred_region
    _
  $region17: #{closed_call.4} parent=0 // pred_fallthru
    _
  // Predicated region
  $region18: #{closed_call.4} parent=0 // pred_check
    _
  $region19: #{closed_call.4} parent=0 // pred_check_branch
    %20 = sbr.rel (0) target = $region21
  $region20: #{closed_call.4} parent=0 // pred_region
    _
  $region21: #{closed_call.4} parent=0 // pred_fallthru
    _
  %s22 = smul.u32 0, 16
  %p23 = scmp.gt.s32.totalorder 0, 0
  // Predicated region
  $region22: #{closed_call.4} parent=0 // pred_check
    %p24 = pneg %p23
  $region23: #{closed_call.4} parent=0 // pred_check_branch
    %26 = sbr.rel (%p24) target = $region25
  $region24: #{closed_call.4} parent=0 // pred_region
    %s27 = ssub.s32 %s22, 16
    %s28 = sshra.s32 %s27, 3
    %s29 = sand.u32 %s27, 7
    %s30 = smul.addr %s28, 4
    %s31 = scalar_lea.vmem %s5, %s30
    %p33 = scmp.lt.u32.totalorder 8, 8
    %p34 = pneg %p33
    // Predicated region
    $region26: #{closed_call.4} parent=24 // pred_check
      _
    $region27: #{closed_call.4} parent=24 // pred_check_branch
      %36 = sbr.rel (%p33) target = $region29
    $region28: #{closed_call.4} parent=24 // pred_region
      %s51 = sand.u32 8, 7
      %p52 = scmp.eq.s32.totalorder %s51, 0
      // Predicated region
      $region41: #{closed_call.4} parent=28 // pred_check
        %p53 = pneg %p52
      $region42: #{closed_call.4} parent=28 // pred_check_branch
        %55 = sbr.rel (%p53) target = $region44
      $region43: #{closed_call.4} parent=28 // pred_region
        loop: start=0, step=1, limit=1
        $region45: #{closed_call.4} parent=43 // loop_pre_header
          _
        $region46: #{closed_call.4} parent=43 // loop_header
          %s57 = sphi 0, %s61
          %p58 = scmp.ge.s32.totalorder %s57, 1
          %s62 = sphi %s31, %s31
          %s63 = sphi [#allocation2], [#allocation2]
        $region47: #{closed_call.4} parent=43 // loop_header_branch
          %60 = sbr.rel (%p58) target = $region51
        $region48: #{closed_call.4} parent=43 // loop_body
          %v64 = vld [vmem:[%s62] sm:$0xff]
          %65 = vst [vmem:[%s63] sm:$0xff] %v64
        $region49: #{closed_call.4} parent=43 // loop_footer
          %s61 = sadd.s32 1, %s57
        $region50: #{closed_call.4} parent=43 // loop_footer_branch
          %56 = sbr.rel target = $region46
        $region51: #{closed_call.4} parent=43 // loop_exit
          _
      $region44: #{closed_call.4} parent=28 // pred_fallthru
        _
      %p66 = pneg %p52
      // Predicated region
      $region52: #{closed_call.4} parent=28 // pred_check
        _
      $region53: #{closed_call.4} parent=28 // pred_check_branch
        %68 = sbr.rel (%p52) target = $region55
      $region54: #{closed_call.4} parent=28 // pred_region
        %s69 = sand.u32 8, 7
      $region55: #{closed_call.4} parent=28 // pred_fallthru
        _
    $region29: #{closed_call.4} parent=24 // pred_fallthru
      _
    // Predicated region
    $region30: #{closed_call.4} parent=24 // pred_check
      %p37 = pneg %p33
    $region31: #{closed_call.4} parent=24 // pred_check_branch
      %39 = sbr.rel (%p37) target = $region33
    $region32: #{closed_call.4} parent=24 // pred_region
      %s40 = sshllo.u32 0, 8
      loop: start=0, step=1, limit=1
      $region34: #{closed_call.4} parent=32 // loop_pre_header
        _
      $region35: #{closed_call.4} parent=32 // loop_header
        %s42 = sphi 0, %s46
        %p43 = scmp.ge.s32.totalorder %s42, 1
        %s47 = sphi %s31, %s31
        %s48 = sphi [#allocation2], [#allocation2]
      $region36: #{closed_call.4} parent=32 // loop_header_branch
        %45 = sbr.rel (%p43) target = $region40
      $region37: #{closed_call.4} parent=32 // loop_body
        %v49 = vld [vmem:[%s47] sm:%s40]
        %50 = vst [vmem:[%s48] sm:%s40] %v49
      $region38: #{closed_call.4} parent=32 // loop_footer
        %s46 = sadd.s32 1, %s42
      $region39: #{closed_call.4} parent=32 // loop_footer_branch
        %41 = sbr.rel target = $region35
      $region40: #{closed_call.4} parent=32 // loop_exit
        _
    $region33: #{closed_call.4} parent=24 // pred_fallthru
      _
    // Predicated region
    $region56: #{closed_call.4} parent=24 // pred_check
      _
    $region57: #{closed_call.4} parent=24 // pred_check_branch
      %72 = sbr.rel (0) target = $region59
    $region58: #{closed_call.4} parent=24 // pred_region
      %73 = vsyncadd [#allocation3], 128
    $region59: #{closed_call.4} parent=24 // pred_fallthru
      _
  $region25: #{closed_call.4} parent=0 // pred_fallthru
    _
  %p74 = scmp.eq.s32.totalorder 0, 0
  // Predicated region
  $region60: #{closed_call.4} parent=0 // pred_check
    %p75 = pneg %p74
  $region61: #{closed_call.4} parent=0 // pred_check_branch
    %77 = sbr.rel (%p75) target = $region63
  $region62: #{closed_call.4} parent=0 // pred_region
    %78 = vst [vmem:[#allocation2] sm:$0xff] 0
  $region63: #{closed_call.4} parent=0 // pred_fallthru
    _
  %p79 = scmp.lt.s32.totalorder 0, 0
  // Predicated region
  $region64: #{closed_call.4} parent=0 // pred_check
    %p80 = pneg %p79
  $region65: #{closed_call.4} parent=0 // pred_check_branch
    %82 = sbr.rel (%p80) target = $region67
  $region66: #{closed_call.4} parent=0 // pred_region
    %s83 = sadd.s32 %s22, 16
    %s84 = sshra.s32 %s83, 3
    %s85 = sand.u32 %s83, 7
    %s86 = smul.addr %s84, 4
    %s87 = scalar_lea.vmem %s5, %s86
    %s88 = scalar_lea.vmem [#allocation2], 16
    %s89 = scalar_lea.sflag [#allocation3], 1
    %p91 = scmp.lt.u32.totalorder 8, 8
    %p92 = pneg %p91
    // Predicated region
    $region68: #{closed_call.4} parent=66 // pred_check
      _
    $region69: #{closed_call.4} parent=66 // pred_check_branch
      %94 = sbr.rel (%p91) target = $region71
    $region70: #{closed_call.4} parent=66 // pred_region
      %s109 = sand.u32 8, 7
      %p110 = scmp.eq.s32.totalorder %s109, 0
      // Predicated region
      $region83: #{closed_call.4} parent=70 // pred_check
        %p111 = pneg %p110
      $region84: #{closed_call.4} parent=70 // pred_check_branch
        %113 = sbr.rel (%p111) target = $region86
      $region85: #{closed_call.4} parent=70 // pred_region
        loop: start=0, step=1, limit=1
        $region87: #{closed_call.4} parent=85 // loop_pre_header
          _
        $region88: #{closed_call.4} parent=85 // loop_header
          %s115 = sphi 0, %s119
          %p116 = scmp.ge.s32.totalorder %s115, 1
          %s120 = sphi %s87, %s87
          %s121 = sphi %s88, %s88
        $region89: #{closed_call.4} parent=85 // loop_header_branch
          %118 = sbr.rel (%p116) target = $region93
        $region90: #{closed_call.4} parent=85 // loop_body
          %v122 = vld [vmem:[%s120] sm:$0xff]
          %123 = vst [vmem:[%s121] sm:$0xff] %v122
        $region91: #{closed_call.4} parent=85 // loop_footer
          %s119 = sadd.s32 1, %s115
        $region92: #{closed_call.4} parent=85 // loop_footer_branch
          %114 = sbr.rel target = $region88
        $region93: #{closed_call.4} parent=85 // loop_exit
          _
      $region86: #{closed_call.4} parent=70 // pred_fallthru
        _
      %p124 = pneg %p110
      // Predicated region
      $region94: #{closed_call.4} parent=70 // pred_check
        _
      $region95: #{closed_call.4} parent=70 // pred_check_branch
        %126 = sbr.rel (%p110) target = $region97
      $region96: #{closed_call.4} parent=70 // pred_region
        %s127 = sand.u32 8, 7
      $region97: #{closed_call.4} parent=70 // pred_fallthru
        _
    $region71: #{closed_call.4} parent=66 // pred_fallthru
      _
    // Predicated region
    $region72: #{closed_call.4} parent=66 // pred_check
      %p95 = pneg %p91
    $region73: #{closed_call.4} parent=66 // pred_check_branch
      %97 = sbr.rel (%p95) target = $region75
    $region74: #{closed_call.4} parent=66 // pred_region
      %s98 = sshllo.u32 0, 8
      loop: start=0, step=1, limit=1
      $region76: #{closed_call.4} parent=74 // loop_pre_header
        _
      $region77: #{closed_call.4} parent=74 // loop_header
        %s100 = sphi 0, %s104
        %p101 = scmp.ge.s32.totalorder %s100, 1
        %s105 = sphi %s87, %s87
        %s106 = sphi %s88, %s88
      $region78: #{closed_call.4} parent=74 // loop_header_branch
        %103 = sbr.rel (%p101) target = $region82
      $region79: #{closed_call.4} parent=74 // loop_body
        %v107 = vld [vmem:[%s105] sm:%s98]
        %108 = vst [vmem:[%s106] sm:%s98] %v107
      $region80: #{closed_call.4} parent=74 // loop_footer
        %s104 = sadd.s32 1, %s100
      $region81: #{closed_call.4} parent=74 // loop_footer_branch
        %99 = sbr.rel target = $region77
      $region82: #{closed_call.4} parent=74 // loop_exit
        _
    $region75: #{closed_call.4} parent=66 // pred_fallthru
      _
    // Predicated region
    $region98: #{closed_call.4} parent=66 // pred_check
      _
    $region99: #{closed_call.4} parent=66 // pred_check_branch
      %130 = sbr.rel (0) target = $region101
    $region100: #{closed_call.4} parent=66 // pred_region
      %131 = vsyncadd %s89, 128
    $region101: #{closed_call.4} parent=66 // pred_fallthru
      _
  $region67: #{closed_call.4} parent=0 // pred_fallthru
    _
  // Predicated region
  $region102: #{closed_call.4} parent=0 // pred_check
    %p132 = pneg %p74
  $region103: #{closed_call.4} parent=0 // pred_check_branch
    %134 = sbr.rel (%p132) target = $region105
  $region104: #{closed_call.4} parent=0 // pred_region
    %135 = vst [vmem:[#allocation2 + $0x10] sm:$0xff] 0
  $region105: #{closed_call.4} parent=0 // pred_fallthru
    _
  %v136 = vld [vmem:[%s0] sm:$0xf]
  %v137 = vld [vmem:[%s0 + $0x4] sm:$0xf]
  %v140 = vunpack.c.l.b16 %v136
  %v141 = vunpack.c.l.b16 %v137
  %v142 = vpack.c.b16 %v141, %v140
  %144 = vst [vmem:[#allocation2 + $0x8] sm:$0xff] %v142
  // Predicated region
  $region106: #{closed_call.4} parent=0 // pred_check
    %p145 = pneg %p23
  $region107: #{closed_call.4} parent=0 // pred_check_branch
    %147 = sbr.rel (%p145) target = $region109
  $region108: #{closed_call.4} parent=0 // pred_region
    %s148 = smul.u32 4, 2
    %s149 = smul.u32 %s148, 1
    %s150 = sshll.u32 %s149, 4
    %151 = dma.done [#allocation3], %s150
  $region109: #{closed_call.4} parent=0 // pred_fallthru
    _
  // Predicated region
  $region110: #{closed_call.4} parent=0 // pred_check
    %p152 = pneg %p79
  $region111: #{closed_call.4} parent=0 // pred_check_branch
    %154 = sbr.rel (%p152) target = $region113
  $region112: #{closed_call.4} parent=0 // pred_region
    %s155 = scalar_lea.sflag [#allocation3], 1
    %s156 = smul.u32 4, 2
    %s157 = smul.u32 %s156, 1
    %s158 = sshll.u32 %s157, 4
    %159 = dma.done %s155, %s158
  $region113: #{closed_call.4} parent=0 // pred_fallthru
    _
  %v160 = vld [vmem:[#allocation2] sm:$0xff]
  %v161 = vld [vmem:[#allocation2 + $0x8] sm:$0xff]
  %v162 = vld [vmem:[#allocation2 + $0x10] sm:$0xff]
  %v163 = vld [vmem:[%s3] sm:$0xf]
  %v164 = vld [vmem:[%s3 + $0x4] sm:$0xf]
  %v165 = vld [vmem:[%s3 + $0x8] sm:$0xf]
  %v166 = vld [vmem:[%s3 + $0xc] sm:$0xf]
  %v167 = vld [vmem:[%s3 + $0x10] sm:$0xf]
  %v168 = vld [vmem:[%s3 + $0x14] sm:$0xf]
  %v169 = vld [vmem:[%s3 + $0x18] sm:$0xf]
  %v170 = vld [vmem:[%s3 + $0x1c] sm:$0xf]
  %v171 = vld [vmem:[%s3 + $0x20] sm:$0xf]
  %v172 = vld [vmem:[%s3 + $0x24] sm:$0xf]
  %v173 = vld [vmem:[%s3 + $0x28] sm:$0xf]
  %v174 = vld [vmem:[%s3 + $0x2c] sm:$0xf]
  %v175 = vld [vmem:[%s3 + $0x30] sm:$0xf]
  %v176 = vld [vmem:[%s3 + $0x34] sm:$0xf]
  %v177 = vld [vmem:[%s3 + $0x38] sm:$0xf]
  %v178 = vld [vmem:[%s3 + $0x3c] sm:$0xf]
  %v195 = vunpack.c.l.b16 %v163
  %v196 = vunpack.c.l.b16 %v164
  %v197 = vunpack.c.l.b16 %v165
  %v198 = vunpack.c.l.b16 %v166
  %v199 = vunpack.c.l.b16 %v167
  %v200 = vunpack.c.l.b16 %v168
  %v201 = vunpack.c.l.b16 %v169
  %v202 = vunpack.c.l.b16 %v170
  %v203 = vunpack.c.l.b16 %v171
  %v204 = vunpack.c.l.b16 %v172
  %v205 = vunpack.c.l.b16 %v173
  %v206 = vunpack.c.l.b16 %v174
  %v207 = vunpack.c.l.b16 %v175
  %v208 = vunpack.c.l.b16 %v176
  %v209 = vunpack.c.l.b16 %v177
  %v210 = vunpack.c.l.b16 %v178
  %v211 = vpack.c.b16 %v196, %v195
  %v212 = vpack.c.b16 %v198, %v197
  %v213 = vpack.c.b16 %v200, %v199
  %v214 = vpack.c.b16 %v202, %v201
  %v215 = vpack.c.b16 %v204, %v203
  %v216 = vpack.c.b16 %v206, %v205
  %v217 = vpack.c.b16 %v208, %v207
  %v218 = vpack.c.b16 %v210, %v209
  %227 = vmatprep.subr.bf16.mxu0 0
  %228 = vmatpush1.bf16.msra.mxu0 %v211
  %229 = vmatprep.subr.bf16.mxu0 0
  %230 = vmatpush1.bf16.msra.mxu0 %v212
  %231 = vmatprep.subr.bf16.mxu0 0
  %232 = vmatpush1.bf16.msra.mxu0 %v213
  %233 = vmatprep.subr.bf16.mxu0 0
  %234 = vmatpush1.bf16.msra.mxu0 %v214
  %235 = vmatprep.subr.bf16.mxu0 0
  %236 = vmatpush1.bf16.msra.mxu0 %v215
  %237 = vmatprep.subr.bf16.mxu0 0
  %238 = vmatpush1.bf16.msra.mxu0 %v216
  %239 = vmatprep.subr.bf16.mxu0 0
  %240 = vmatpush1.bf16.msra.mxu0 %v217
  %241 = vmatprep.subr.bf16.mxu0 0
  %242 = vmatpush1.bf16.msra.mxu0 %v218
  %243 = vmatprep.subr.bf16.mxu0 0
  %244 = vmatpush1.bf16.msra.mxu0 0
  %245 = vmatprep.subr.bf16.mxu0 0
  %246 = vmatpush1.bf16.msra.mxu0 0
  %247 = vmatprep.subr.bf16.mxu0 0
  %248 = vmatpush1.bf16.msra.mxu0 0
  %249 = vmatprep.subr.bf16.mxu0 0
  %250 = vmatpush1.bf16.msra.mxu0 0
  %251 = vmatprep.subr.bf16.mxu0 0
  %252 = vmatpush1.bf16.msra.mxu0 0
  %253 = vmatprep.subr.bf16.mxu0 0
  %254 = vmatpush1.bf16.msra.mxu0 0
  %255 = vmatprep.subr.bf16.mxu0 0
  %256 = vmatpush1.bf16.msra.mxu0 0
  %257 = vmatprep.subr.bf16.mxu0 0
  %258 = vmatpush1.bf16.msra.mxu0 0
  %259 = vmatprep.mubr.bf16.mxu0 0
  %260 = vmatmul.mubr.bf16.gmra.mrb[0].mxu0 %v160
  %v261 = vpop.f32.mrb[0].mxu0
  %v262 = vpop.f32.mrb[0].mxu0
  %v263 = vpop.f32.mrb[0].mxu0
  %v264 = vadd.f32 0.0, %v263
  %v265 = vpop.f32.mrb[0].mxu0
  %266 = vmatprep.mubr.bf16.mxu0 0
  %267 = vmatmul.mubr.bf16.gmra.mrb[0].mxu0 %v161
  %v268 = vpop.f32.mrb[0].mxu0
  %v269 = vadd.f32 0.0, %v268
  %v270 = vpop.f32.mrb[0].mxu0
  %v271 = vpop.f32.mrb[0].mxu0
  %v272 = vadd.f32 0.0, %v271
  %v273 = vpop.f32.mrb[0].mxu0
  %274 = vmatprep.mubr.bf16.mxu0 0
  %275 = vmatmul.mubr.bf16.gmra.mrb[0].mxu0 %v162
  %v276 = vpop.f32.mrb[0].mxu0
  %v277 = vadd.f32 0.0, %v276
  %v278 = vpop.f32.mrb[0].mxu0
  %v279 = vpop.f32.mrb[0].mxu0
  %v280 = vpop.f32.mrb[0].mxu0
  %281 = vdwg.mxu0
  %vm286 = vcmask 1040384
  %v287 = vrot.slane %v264, 7
  %v288 = vrot.slane %v269, 7
  %v289 = vsel %vm286, %v287, %v288
  %v290 = vrot.slane %v272, 7
  %v291 = vsel %vm286, %v288, %v290
  %v292 = vrot.slane %v277, 7
  %v293 = vsel %vm286, %v290, %v292
  %294 = vrot.lane.b32.xlu0 %v289, 96
  %v295 = vpop.permute.xlu0 %294
  %296 = vrot.lane.b32.xlu0 %v291, 96
  %v297 = vpop.permute.xlu0 %296
  %298 = vrot.lane.b32.xlu0 %v293, 96
  %v299 = vpop.permute.xlu0 %298
  %v303 = vadd.f32 %v269, %v295
  %v304 = vadd.f32 %v272, %v297
  %v305 = vadd.f32 %v277, %v299
  %vm306 = vcmask 1041408
  %v307 = vrot.slane %v264, 6
  %v308 = vrot.slane %v269, 6
  %v309 = vsel %vm306, %v307, %v308
  %v310 = vrot.slane %v272, 6
  %v311 = vsel %vm306, %v308, %v310
  %v312 = vrot.slane %v277, 6
  %v313 = vsel %vm306, %v310, %v312
  %314 = vrot.lane.b32.xlu0 %v309, 64
  %v315 = vpop.permute.xlu0 %314
  %316 = vrot.lane.b32.xlu0 %v311, 64
  %v317 = vpop.permute.xlu0 %316
  %318 = vrot.lane.b32.xlu0 %v313, 64
  %v319 = vpop.permute.xlu0 %318
  %v323 = vadd.f32 %v303, %v315
  %v324 = vadd.f32 %v304, %v317
  %v325 = vadd.f32 %v305, %v319
  %vm326 = vcmask 1042432
  %v327 = vrot.slane %v264, 5
  %v328 = vrot.slane %v269, 5
  %v329 = vsel %vm326, %v327, %v328
  %v330 = vrot.slane %v272, 5
  %v331 = vsel %vm326, %v328, %v330
  %v332 = vrot.slane %v277, 5
  %v333 = vsel %vm326, %v330, %v332
  %334 = vrot.lane.b32.xlu0 %v329, 32
  %v335 = vpop.permute.xlu0 %334
  %336 = vrot.lane.b32.xlu0 %v331, 32
  %v337 = vpop.permute.xlu0 %336
  %338 = vrot.lane.b32.xlu0 %v333, 32
  %v339 = vpop.permute.xlu0 %338
  %v343 = vadd.f32 %v323, %v335
  %v344 = vadd.f32 %v324, %v337
  %v345 = vadd.f32 %v325, %v339
  %v346 = vld [vmem:[%s2] sm:$0xff]
  %v347 = vld [vmem:[%s2 + $0x8] sm:$0xff]
  %v348 = vld [vmem:[%s2 + $0x10] sm:$0xff]
  %v349 = vmul.f32 %v343, %v346
  %v350 = vmul.f32 %v344, %v347
  %v351 = vmul.f32 %v345, %v348
  %vm355 = vcmask 1046528
  %v356 = vrot.slane %v349, 1
  %v357 = vrot.slane %v350, 1
  %v358 = vsel %vm355, %v356, %v357
  %v359 = vrot.slane %v351, 1
  %v360 = vsel %vm355, %v357, %v359
  %361 = vrot.lane.b32.xlu0 %v358, 32
  %v362 = vpop.permute.xlu0 %361
  %363 = vrot.lane.b32.xlu0 %v360, 32
  %v364 = vpop.permute.xlu0 %363
  %vm367 = vcmask 1045504
  %v368 = vrot.slane %v349, 2
  %v369 = vrot.slane %v350, 2
  %v370 = vsel %vm367, %v368, %v369
  %v371 = vrot.slane %v351, 2
  %v372 = vsel %vm367, %v369, %v371
  %373 = vrot.lane.b32.xlu0 %v370, 64
  %v374 = vpop.permute.xlu0 %373
  %375 = vrot.lane.b32.xlu0 %v372, 64
  %v376 = vpop.permute.xlu0 %375
  %vm379 = vcmask 1044480
  %v380 = vrot.slane %v349, 3
  %v381 = vrot.slane %v350, 3
  %v382 = vsel %vm379, %v380, %v381
  %v383 = vrot.slane %v351, 3
  %v384 = vsel %vm379, %v381, %v383
  %385 = vrot.lane.b32.xlu0 %v382, 96
  %v386 = vpop.permute.xlu0 %385
  %387 = vrot.lane.b32.xlu0 %v384, 96
  %v388 = vpop.permute.xlu0 %387
  %vm391 = vcmask 261120
  %v392 = vsel %vm391, %v349, %v362
  %v393 = vsel %vm391, %v350, %v364
  %vm394 = vcmask 523264
  %v395 = vsel %vm394, %v392, %v374
  %v396 = vsel %vm394, %v393, %v376
  %vm397 = vcmask 785408
  %v398 = vsel %vm397, %v395, %v386
  %v399 = vsel %vm397, %v396, %v388
  %v400 = vpack.c.bf16 %v399, %v398
  %v401 = vld [vmem:[%s4] sm:$0xf]
  %v402 = vld [vmem:[%s4 + $0x4] sm:$0xf]
  %v403 = vld [vmem:[%s4 + $0x8] sm:$0xf]
  %v404 = vld [vmem:[%s4 + $0xc] sm:$0xf]
  %v405 = vld [vmem:[%s4 + $0x10] sm:$0xf]
  %v406 = vld [vmem:[%s4 + $0x14] sm:$0xf]
  %v407 = vld [vmem:[%s4 + $0x18] sm:$0xf]
  %v408 = vld [vmem:[%s4 + $0x1c] sm:$0xf]
  %v409 = vld [vmem:[%s4 + $0x20] sm:$0xf]
  %v410 = vld [vmem:[%s4 + $0x24] sm:$0xf]
  %v411 = vld [vmem:[%s4 + $0x28] sm:$0xf]
  %v412 = vld [vmem:[%s4 + $0x2c] sm:$0xf]
  %v413 = vld [vmem:[%s4 + $0x30] sm:$0xf]
  %v414 = vld [vmem:[%s4 + $0x34] sm:$0xf]
  %v415 = vld [vmem:[%s4 + $0x38] sm:$0xf]
  %v416 = vld [vmem:[%s4 + $0x3c] sm:$0xf]
  %v433 = vunpack.c.l.b16 %v401
  %v434 = vunpack.c.l.b16 %v402
  %v435 = vunpack.c.l.b16 %v403
  %v436 = vunpack.c.l.b16 %v404
  %v437 = vunpack.c.l.b16 %v405
  %v438 = vunpack.c.l.b16 %v406
  %v439 = vunpack.c.l.b16 %v407
  %v440 = vunpack.c.l.b16 %v408
  %v441 = vunpack.c.l.b16 %v409
  %v442 = vunpack.c.l.b16 %v410
  %v443 = vunpack.c.l.b16 %v411
  %v444 = vunpack.c.l.b16 %v412
  %v445 = vunpack.c.l.b16 %v413
  %v446 = vunpack.c.l.b16 %v414
  %v447 = vunpack.c.l.b16 %v415
  %v448 = vunpack.c.l.b16 %v416
  %v449 = vpack.c.b16 %v434, %v433
  %v450 = vpack.c.b16 %v436, %v435
  %v451 = vpack.c.b16 %v438, %v437
  %v452 = vpack.c.b16 %v440, %v439
  %v453 = vpack.c.b16 %v442, %v441
  %v454 = vpack.c.b16 %v444, %v443
  %v455 = vpack.c.b16 %v446, %v445
  %v456 = vpack.c.b16 %v448, %v447
  %465 = vmatprep.subr.bf16.mxu0 0
  %466 = vmatpush1.bf16.msra.mxu0 %v449
  %467 = vmatprep.subr.bf16.mxu0 0
  %468 = vmatpush1.bf16.msra.mxu0 %v450
  %469 = vmatprep.subr.bf16.mxu0 0
  %470 = vmatpush1.bf16.msra.mxu0 %v451
  %471 = vmatprep.subr.bf16.mxu0 0
  %472 = vmatpush1.bf16.msra.mxu0 %v452
  %473 = vmatprep.subr.bf16.mxu0 0
  %474 = vmatpush1.bf16.msra.mxu0 %v453
  %475 = vmatprep.subr.bf16.mxu0 0
  %476 = vmatpush1.bf16.msra.mxu0 %v454
  %477 = vmatprep.subr.bf16.mxu0 0
  %478 = vmatpush1.bf16.msra.mxu0 %v455
  %479 = vmatprep.subr.bf16.mxu0 0
  %480 = vmatpush1.bf16.msra.mxu0 %v456
  %481 = vmatprep.subr.bf16.mxu0 0
  %482 = vmatpush1.bf16.msra.mxu0 0
  %483 = vmatprep.subr.bf16.mxu0 0
  %484 = vmatpush1.bf16.msra.mxu0 0
  %485 = vmatprep.subr.bf16.mxu0 0
  %486 = vmatpush1.bf16.msra.mxu0 0
  %487 = vmatprep.subr.bf16.mxu0 0
  %488 = vmatpush1.bf16.msra.mxu0 0
  %489 = vmatprep.subr.bf16.mxu0 0
  %490 = vmatpush1.bf16.msra.mxu0 0
  %491 = vmatprep.subr.bf16.mxu0 0
  %492 = vmatpush1.bf16.msra.mxu0 0
  %493 = vmatprep.subr.bf16.mxu0 0
  %494 = vmatpush1.bf16.msra.mxu0 0
  %495 = vmatprep.subr.bf16.mxu0 0
  %496 = vmatpush1.bf16.msra.mxu0 0
  %497 = vmatprep.mubr.bf16.mxu0 0
  %498 = vmatmul.mubr.bf16.gmra.mrb[0].mxu0 %v400
  %v499 = vpop.f32.mrb[0].mxu0
  %v500 = vadd.f32 0.0, %v499
  %v501 = vpop.f32.mrb[0].mxu0
  %v502 = vpop.f32.mrb[0].mxu0
  %v503 = vadd.f32 0.0, %v502
  %v504 = vpop.f32.mrb[0].mxu0
  %505 = vdwg.mxu0
  %v506 = vmul.f32 %v500, %v500
  %v507 = vmul.f32 %v503, %v503
  %510 = vrot.lane.b32.xlu0 %v506, 64
  %v511 = vpop.permute.xlu0 %510
  %512 = vrot.lane.b32.xlu0 %v507, 64
  %v513 = vpop.permute.xlu0 %512
  %v516 = vadd.f32 %v506, %v511
  %v517 = vadd.f32 %v507, %v513
  %520 = vrot.lane.b32.xlu0 %v516, 64
  %v521 = vpop.permute.xlu0 %520
  %522 = vrot.lane.b32.xlu0 %v517, 64
  %v523 = vpop.permute.xlu0 %522
  %v526 = vsel %vm394, %v516, %v521
  %v527 = vsel %vm394, %v517, %v523
  %v528 = vlaneseq
  %v529 = vand.u32 %v528, 127
  %vm530 = vcmp.eq.s32.totalorder %v529, 0
  %vm531 = vcmp.eq.s32.totalorder %v529, 64
  %vm532 = vmor %vm530, %vm531
  %v533 = vsel %vm532, %v506, %v526
  %v534 = vsel %vm532, %v507, %v527
  %v535 = vld [vmem:[%s1] sm:$0xf]
  %v536 = vld [vmem:[%s1 + $0x4] sm:$0xf]
  %v537 = vunpack.c.l.bf16 %v535
  %v538 = vunpack.c.l.bf16 %v536
  %v539 = vmax.f32 %v533, 1e-16
  %v540 = vmax.f32 %v534, 1e-16
  %v541 = vrsqrt.pop %v539
  %v542 = vrsqrt.pop %v540
  %v543 = vmul.f32 %v537, %v541
  %v544 = vmul.f32 %v538, %v542
  %v545 = vmul.f32 %v500, %v543
  %v546 = vmul.f32 %v503, %v544
  %v547 = vpack.c.bf16 %v546, %v545
  %v549 = vunpack.c.l.b16 %v547
  %v550 = vunpack.c.h.b16 %v547
  %v551 = vpack.c.b16 %v549, %v549
  %v552 = vpack.c.b16 %v550, %v550
  %555 = vst [vmem:[%s6] sm:$0xf] %v551
  %556 = vst [vmem:[%s6 + $0x4] sm:$0xf] %v552
  // Predicated region
  $region114: #{closed_call.4} parent=0 // pred_check
    _
  $region115: #{closed_call.4} parent=0 // pred_check_branch
    %558 = sbr.rel (0) target = $region117
  $region116: #{closed_call.4} parent=0 // pred_region
    _
  $region117: #{closed_call.4} parent=0 // pred_fallthru
    _
  // Predicated region
  $region118: #{closed_call.4} parent=0 // pred_check
    _
  $region119: #{closed_call.4} parent=0 // pred_check_branch
    %560 = sbr.rel (0) target = $region121
  $region120: #{closed_call.4} parent=0 // pred_region
    _
  $region121: #{closed_call.4} parent=0 // pred_fallthru
    _
  %561 = vsyncmov [#allocation3]
  %s562 = vpop.sfrf %561
  %p563 = scmp.eq.s32.totalorder %s562, 0
  %p564 = pneg %p563
  %566 = shalt.err (%p564)
  %s567 = scalar_lea.sflag [#allocation3], 1
  %568 = vsyncmov %s567
  %s569 = vpop.sfrf %568
  %p570 = scmp.eq.s32.totalorder %s569, 0
  %p571 = pneg %p570
  %573 = shalt.err (%p571)

</llo_original>
